<compile_context>
chip_gen: v5e
topology: v5e:2x2
jax: 0.10.0
libtpu: 0.0.40
codegen_flags: <defaults>
</compile_context>

<pallas_src>
import functools

import jax
import jax.numpy as jnp
from jax import lax
from jax.experimental import pallas as pl
from jax.experimental.pallas import tpu as pltpu

EPS = 1e-5


# --------------------------------------------------------------------------
# Kernel bodies (channel-major tiles: channels on sublanes, positions on lanes,
# NB batch elements on the free leading block dim -> no in-kernel relayouts).
# --------------------------------------------------------------------------
def _pass1_kernel(x_ref, w1_ref, z1_ref, s_ref, ss_ref):
    """conv1 (k=3, pad=1, no bias) for NB elements; store z1, emit stat partials."""
    nb = x_ref.shape[0]
    c_out = z1_ref.shape[1]
    length = z1_ref.shape[2]
    s = jnp.zeros((c_out, 1), jnp.float32)
    ss = jnp.zeros((c_out, 1), jnp.float32)
    for b in range(nb):
        xp = x_ref[b]                                        # (Cin, L+2) bf16
        # Three accumulating tap matmuls on lane-shifted views (no im2col).
        z = (jnp.dot(w1_ref[0], xp[:, 0:length],
                     preferred_element_type=jnp.float32)
             + jnp.dot(w1_ref[1], xp[:, 1:length + 1],
                       preferred_element_type=jnp.float32)
             + jnp.dot(w1_ref[2], xp[:, 2:length + 2],
                       preferred_element_type=jnp.float32))  # (Cout, L) f32
        z1_ref[b] = z
        s = s + jnp.sum(z, axis=1, keepdims=True)
        ss = ss + jnp.sum(z * z, axis=1, keepdims=True)
    s_ref[0] = s
    ss_ref[0] = ss


def _pass2_kernel(z1_ref, w2_ref, sc1_ref, sh1_ref, z2_ref, s_ref, ss_ref, *,
                  n_valid):
    """Folded BN1 + ReLU + conv2 (k=1, no bias); store z2, emit stat partials."""
    nb = z1_ref.shape[0]
    c_out = z1_ref.shape[1]
    sc1 = sc1_ref[...]
    sh1 = sh1_ref[...]
    s = jnp.zeros((c_out, 1), jnp.float32)
    ss = jnp.zeros((c_out, 1), jnp.float32)
    for b in range(nb):
        h1 = jnp.maximum(sc1 * z1_ref[b] + sh1, 0.0).astype(jnp.bfloat16)
        z2 = jnp.dot(w2_ref[...], h1,
                     preferred_element_type=jnp.float32)     # (Cout, L) f32
        z2_ref[b] = z2
        ps = jnp.sum(z2, axis=1, keepdims=True)
        pss = jnp.sum(z2 * z2, axis=1, keepdims=True)
        if n_valid is not None:
            # Batch was zero-padded to a multiple of NB: padded elements give
            # z1 == 0 exactly (zero stats-1 contribution), but h1 = relu(shift1)
            # is non-zero, so exclude them from the BN2 statistics.
            keep = (pl.program_id(0) * nb + b < n_valid).astype(jnp.float32)
            ps = ps * keep
            pss = pss * keep
        s = s + ps
        ss = ss + pss
    s_ref[0] = s
    ss_ref[0] = ss


def _pass3_kernel(z2_ref, sc2_ref, sh2_ref, out_ref):
    """Elementwise folded BN2 + ReLU; direct sub-slice stores, NCL output."""
    nb = z2_ref.shape[0]
    c_out = z2_ref.shape[1]
    length = z2_ref.shape[2]
    sc2 = sc2_ref[...]
    sh2 = sh2_ref[...]
    for b in range(nb):
        a = jnp.maximum(sc2 * z2_ref[b] + sh2, 0.0)          # (Cout, L)
        out_ref[b, :, 1:length + 1] = a.astype(out_ref.dtype)
    # conv2's padded positions see only its bias; with the bias folded into
    # shift2 they normalize to relu(shift2) -- batch independent, written once.
    bnd = jnp.maximum(sh2, 0.0).astype(out_ref.dtype)        # (Cout, 1)
    bnd_blk = jnp.broadcast_to(bnd[None, :, :], (nb, c_out, 1))
    out_ref[:, :, 0:1] = bnd_blk
    out_ref[:, :, length + 1:length + 2] = bnd_blk


# --------------------------------------------------------------------------
# Wrapper helpers
# --------------------------------------------------------------------------
def _vmem_limit_bytes():
    """~3/4 of physical VMEM, capped at 100 MiB (v7x ~48 MiB, v5e/v6e ~96 MiB)."""
    cap = None
    try:
        cap = getattr(pltpu.get_tpu_info(), "vmem_capacity_bytes", None)
    except Exception:
        cap = None
    if not cap:
        cap = 64 * 1024 * 1024          # conservative fallback: v7x physical VMEM
    return int(min(cap * 3 // 4, 100 * 1024 * 1024))


def _const_spec(shape, single_buffer):
    """Full-array BlockSpec for grid-invariant operands (optionally 1-buffered)."""
    ndim = len(shape)
    index_map = lambda i: (0,) * ndim
    if single_buffer:
        try:
            return pl.BlockSpec(shape, index_map, pipeline_mode=pl.Buffered(1))
        except TypeError:
            pass
    return pl.BlockSpec(shape, index_map)


# --------------------------------------------------------------------------
# Forward
# --------------------------------------------------------------------------
def basic_conv_module_forward(x, params, *, single_buffer_consts=True):
    """x: (N, ch_in, L) float32  ->  (N, ch_out, L+2) float32."""
    w1, b1, g1, be1, w2, b2, g2, be2 = params
    n, c_in, length = x.shape
    c_out = w1.shape[0]
    p = length + 2

    # ---- per-generation VMEM budget -> elements per grid step (NB) ---------
    vmem_limit = _vmem_limit_bytes()
    bytes_per_elem = (2 * c_in * p * 2               # x tile (bf16, 2 buffers)
                      + 4 * 2 * c_out * length * 4   # z1/z2 in+out (f32, 2 buf)
                      + 2 * c_out * p * 4            # output tile (f32, 2 buf)
                      + 2 * c_out * length * 4)      # in-kernel temporaries
    nb = max(1, min(n, 16, (vmem_limit // 2) // max(bytes_per_elem, 1)))
    num_blocks = -(-n // nb)
    n_pad = num_blocks * nb

    # ---- cheap HBM prep: one pad(+batch)+cast pass over x, bf16 weights ----
    x_p = jnp.pad(x, ((0, n_pad - n), (0, 0), (1, 1))).astype(jnp.bfloat16)
    w1_t = jnp.transpose(w1, (2, 0, 1)).astype(jnp.bfloat16)    # (3, Cout, Cin)
    w2_m = w2[:, :, 0].astype(jnp.bfloat16)                     # (Cout, Cout)

    def col(v):
        return v.astype(jnp.float32).reshape(c_out, 1)

    def batched(c, last):
        return pl.BlockSpec((nb, c, last), lambda i: (i, 0, 0))

    stat_spec = pl.BlockSpec((1, c_out, 1), lambda i: (i, 0, 0))
    stat_shape = jax.ShapeDtypeStruct((num_blocks, c_out, 1), jnp.float32)
    cparams = pltpu.CompilerParams(
        dimension_semantics=("parallel",),   # fully parallel -> v7x megacore-safe
        vmem_limit_bytes=vmem_limit)

    # ---- pass 1: conv1 (no bias) -> z1 + BN1 partial stats ------------------
    z1, s1p, ss1p = pl.pallas_call(
        _pass1_kernel,
        grid=(num_blocks,),
        in_specs=[batched(c_in, p),
                  _const_spec((3, c_out, c_in), single_buffer_consts)],
        out_specs=(batched(c_out, length), stat_spec, stat_spec),
        out_shape=(jax.ShapeDtypeStruct((n_pad, c_out, length), jnp.float32),
                   stat_shape, stat_shape),
        compiler_params=cparams,
    )(x_p, w1_t)

    # Tiny f32 stat math in plain JAX.  NOTE: one-pass E[x^2]-E[x]^2; the clamp
    # guards small negative values from cancellation (switch to shifted sums if
    # inputs are far from centered).
    b1f = b1.astype(jnp.float32)
    m1 = jnp.float32(n * length)
    s1 = jnp.sum(s1p, axis=(0, 2))
    ss1 = jnp.sum(ss1p, axis=(0, 2))
    mean1 = (s1 + m1 * b1f) / m1
    var1 = jnp.maximum(
        (ss1 + 2.0 * b1f * s1 + m1 * b1f * b1f) / m1 - mean1 * mean1, 0.0)
    scale1 = g1.astype(jnp.float32) * lax.rsqrt(var1 + EPS)
    shift1 = be1.astype(jnp.float32) - mean1 * scale1 + scale1 * b1f  # b1 folded

    # ---- pass 2: BN1 + ReLU -> conv2 (no bias) -> z2 + BN2 partial stats ----
    z2, s2p, ss2p = pl.pallas_call(
        functools.partial(_pass2_kernel,
                          n_valid=(n if n_pad != n else None)),
        grid=(num_blocks,),
        in_specs=[batched(c_out, length),
                  _const_spec((c_out, c_out), single_buffer_consts),
                  _const_spec((c_out, 1), single_buffer_consts),
                  _const_spec((c_out, 1), single_buffer_consts)],
        out_specs=(batched(c_out, length), stat_spec, stat_spec),
        out_shape=(jax.ShapeDtypeStruct((n_pad, c_out, length), jnp.float32),
                   stat_shape, stat_shape),
        compiler_params=cparams,
    )(z1, w2_m, col(scale1), col(shift1))

    b2f = b2.astype(jnp.float32)
    m2 = jnp.float32(n * p)              # conv2 pad=1 grows the length to L+2
    s2 = jnp.sum(s2p, axis=(0, 2))
    ss2 = jnp.sum(ss2p, axis=(0, 2))
    # conv2's boundary columns equal b2 exactly (their conv part is 0), so the
    # analytic +b2 fold below covers all m2 positions.
    mean2 = (s2 + m2 * b2f) / m2
    var2 = jnp.maximum(
        (ss2 + 2.0 * b2f * s2 + m2 * b2f * b2f) / m2 - mean2 * mean2, 0.0)
    scale2 = g2.astype(jnp.float32) * lax.rsqrt(var2 + EPS)
    shift2 = be2.astype(jnp.float32) - mean2 * scale2 + scale2 * b2f  # b2 folded

    # ---- pass 3: elementwise BN2 + ReLU -> NCL output -----------------------
    out = pl.pallas_call(
        _pass3_kernel,
        grid=(num_blocks,),
        in_specs=[batched(c_out, length),
                  _const_spec((c_out, 1), single_buffer_consts),
                  _const_spec((c_out, 1), single_buffer_consts)],
        out_specs=batched(c_out, p),
        out_shape=jax.ShapeDtypeStruct((n_pad, c_out, p), jnp.float32),
        compiler_params=cparams,
    )(z2, col(scale2), col(shift2))

    return out if n_pad == n else out[:n]


# --------------------------------------------------------------------------
# Pure-JAX reference (f32, identical training-mode BN semantics)
# --------------------------------------------------------------------------
def _reference_forward(x, params):
    w1, b1, g1, be1, w2, b2, g2, be2 = params

    def conv1d(x, w, b, pad):
        return lax.conv_general_dilated(
            x, w, window_strides=(1,), padding=[(pad, pad)],
            dimension_numbers=("NCH", "OIH", "NCH")) + b[None, :, None]

    def bn_relu(y, g, be):
        mean = jnp.mean(y, axis=(0, 2), keepdims=True)
        var = jnp.mean((y - mean) ** 2, axis=(0, 2), keepdims=True)
        y = g[None, :, None] * (y - mean) * lax.rsqrt(var + EPS) + be[None, :, None]
        return jnp.maximum(y, 0.0)

    h = bn_relu(conv1d(x, w1, b1, 1), g1, be1)
    return bn_relu(conv1d(h, w2, b2, 1), g2, be2)


def _init_params(key, c_in, c_out):
    ks = jax.random.split(key, 4)
    w1 = jax.random.normal(ks[0], (c_out, c_in, 3), jnp.float32) * 0.2
    b1 = jax.random.normal(ks[1], (c_out,), jnp.float32) * 0.1
    w2 = jax.random.normal(ks[2], (c_out, c_out, 1), jnp.float32) * 0.2
    b2 = jax.random.normal(ks[3], (c_out,), jnp.float32) * 0.1
    g1 = jnp.ones((c_out,), jnp.float32)   # BatchNorm defaults
    be1 = jnp.zeros((c_out,), jnp.float32)
    g2 = jnp.ones((c_out,), jnp.float32)
    be2 = jnp.zeros((c_out,), jnp.float32)
    return (w1, b1, g1, be1, w2, b2, g2, be2)


if __name__ == "__main__":
    key = jax.random.PRNGKey(0)
    k_x, k_p = jax.random.split(key)

    N, C_IN, C_OUT, L = 2, 4, 8, 16
    x = jax.random.normal(k_x, (N, C_IN, L), jnp.float32)
    params = _init_params(k_p, C_IN, C_OUT)

    try:
        out = jax.block_until_ready(basic_conv_module_forward(x, params))
    except Exception:
        # Graceful fallback if this JAX build rejects single-buffering
        # (pl.Buffered(1)) of the grid-invariant operands.
        out = jax.block_until_ready(
            basic_conv_module_forward(x, params, single_buffer_consts=False))

    ref = _reference_forward(x, params)

    assert out.shape == (N, C_OUT, L + 2), out.shape
    # bf16 MXU operands -> compare against the f32 reference at bf16 tolerance.
    assert jnp.allclose(out, ref, atol=5e-2, rtol=5e-2), (
        "mismatch vs reference; max abs err = "
        f"{float(jnp.max(jnp.abs(out - ref)))}")

    print("KERNEL_OK")
</pallas_src>

<mosaic_0001>
module attributes {stable_mosaic.version = 11 : i64} {
  func.func @_pass1_kernel(%arg0: i32, %arg1: memref<2x4x18xbf16, #tpu.memory_space<vmem>>, %arg2: memref<3x8x4xbf16, #tpu.memory_space<vmem>>, %arg3: memref<2x8x16xf32, #tpu.memory_space<vmem>>, %arg4: memref<1x8x1xf32, #tpu.memory_space<vmem>>, %arg5: memref<1x8x1xf32, #tpu.memory_space<vmem>>) attributes {dimension_semantics = [#tpu.dimension_semantics<parallel>], iteration_bounds = array<i64: 1>, scalar_prefetch = 0 : i64, scratch_operands = 0 : i64, tpu.core_type = #tpu.core_type<tc>, window_params = [{transform_indices = @transform_0, window_bounds = array<i64: 2, 4, 18>}, {pipeline_mode = #tpu.pipeline_mode<synchronous>, transform_indices = @transform_1, window_bounds = array<i64: 3, 8, 4>}, {transform_indices = @transform_2, window_bounds = array<i64: 2, 8, 16>}, {transform_indices = @transform_3, window_bounds = array<i64: 1, 8, 1>}, {transform_indices = @transform_4, window_bounds = array<i64: 1, 8, 1>}]} {
    %cst = arith.constant 0.000000e+00 : f32
    %0 = vector.broadcast %cst : f32 to vector<8x1xf32>
    %cst_0 = arith.constant 0.000000e+00 : f32
    %1 = vector.broadcast %cst_0 : f32 to vector<8x1xf32>
    %c0 = arith.constant 0 : index
    %c0_1 = arith.constant 0 : index
    %c0_2 = arith.constant 0 : index
    %2 = vector.load %arg1[%c0, %c0_1, %c0_2] : memref<2x4x18xbf16, #tpu.memory_space<vmem>>, vector<1x4x18xbf16>
    %3 = vector.shape_cast %2 : vector<1x4x18xbf16> to vector<4x18xbf16>
    %c0_3 = arith.constant 0 : index
    %c0_4 = arith.constant 0 : index
    %c0_5 = arith.constant 0 : index
    %4 = vector.load %arg2[%c0_3, %c0_4, %c0_5] : memref<3x8x4xbf16, #tpu.memory_space<vmem>>, vector<1x8x4xbf16>
    %5 = vector.shape_cast %4 : vector<1x8x4xbf16> to vector<8x4xbf16>
    %6 = vector.extract_strided_slice %3 {offsets = [0, 0], sizes = [4, 16], strides = [1, 1]} : vector<4x18xbf16> to vector<4x16xbf16>
    %cst_6 = arith.constant dense<0.000000e+00> : vector<8x16xf32>
    %7 = tpu.matmul %5, %6, %cst_6 {dimension_numbers = #tpu.dot_dimension_numbers<[1], [0], [0], [1], [0, 0, 1, 1], [], []>} : vector<8x4xbf16>, vector<4x16xbf16>, vector<8x16xf32> -> vector<8x16xf32>
    %c1 = arith.constant 1 : index
    %c0_7 = arith.constant 0 : index
    %c0_8 = arith.constant 0 : index
    %8 = vector.load %arg2[%c1, %c0_7, %c0_8] : memref<3x8x4xbf16, #tpu.memory_space<vmem>>, vector<1x8x4xbf16>
    %9 = vector.shape_cast %8 : vector<1x8x4xbf16> to vector<8x4xbf16>
    %10 = vector.extract_strided_slice %3 {offsets = [0, 1], sizes = [4, 16], strides = [1, 1]} : vector<4x18xbf16> to vector<4x16xbf16>
    %cst_9 = arith.constant dense<0.000000e+00> : vector<8x16xf32>
    %11 = tpu.matmul %9, %10, %cst_9 {dimension_numbers = #tpu.dot_dimension_numbers<[1], [0], [0], [1], [0, 0, 1, 1], [], []>} : vector<8x4xbf16>, vector<4x16xbf16>, vector<8x16xf32> -> vector<8x16xf32>
    %12 = arith.addf %7, %11 : vector<8x16xf32>
    %c2 = arith.constant 2 : index
    %c0_10 = arith.constant 0 : index
    %c0_11 = arith.constant 0 : index
    %13 = vector.load %arg2[%c2, %c0_10, %c0_11] : memref<3x8x4xbf16, #tpu.memory_space<vmem>>, vector<1x8x4xbf16>
    %14 = vector.shape_cast %13 : vector<1x8x4xbf16> to vector<8x4xbf16>
    %15 = vector.extract_strided_slice %3 {offsets = [0, 2], sizes = [4, 16], strides = [1, 1]} : vector<4x18xbf16> to vector<4x16xbf16>
    %cst_12 = arith.constant dense<0.000000e+00> : vector<8x16xf32>
    %16 = tpu.matmul %14, %15, %cst_12 {dimension_numbers = #tpu.dot_dimension_numbers<[1], [0], [0], [1], [0, 0, 1, 1], [], []>} : vector<8x4xbf16>, vector<4x16xbf16>, vector<8x16xf32> -> vector<8x16xf32>
    %17 = arith.addf %12, %16 : vector<8x16xf32>
    %c0_13 = arith.constant 0 : index
    %c0_14 = arith.constant 0 : index
    %c0_15 = arith.constant 0 : index
    %18 = vector.load %arg3[%c0_13, %c0_14, %c0_15] : memref<2x8x16xf32, #tpu.memory_space<vmem>>, vector<1x8x16xf32>
    %19 = vector.shape_cast %18 : vector<1x8x16xf32> to vector<8x16xf32>
    %20 = vector.shape_cast %17 : vector<8x16xf32> to vector<1x8x16xf32>
    tpu.vector_store %arg3[%c0_13, %c0_14, %c0_15], %20 {strides = array<i32>} : memref<2x8x16xf32, #tpu.memory_space<vmem>>, vector<1x8x16xf32>,
    %cst_16 = arith.constant dense<0.000000e+00> : vector<8xf32>
    %21 = vector.multi_reduction <add>, %17, %cst_16 [1] : vector<8x16xf32> to vector<8xf32>
    %22 = vector.shape_cast %21 : vector<8xf32> to vector<8x1xf32>
    %23 = arith.addf %0, %22 : vector<8x1xf32>
    %24 = arith.mulf %17, %17 : vector<8x16xf32>
    %cst_17 = arith.constant dense<0.000000e+00> : vector<8xf32>
    %25 = vector.multi_reduction <add>, %24, %cst_17 [1] : vector<8x16xf32> to vector<8xf32>
    %26 = vector.shape_cast %25 : vector<8xf32> to vector<8x1xf32>
    %27 = arith.addf %1, %26 : vector<8x1xf32>
    %c1_18 = arith.constant 1 : index
    %c0_19 = arith.constant 0 : index
    %c0_20 = arith.constant 0 : index
    %28 = vector.load %arg1[%c1_18, %c0_19, %c0_20] : memref<2x4x18xbf16, #tpu.memory_space<vmem>>, vector<1x4x18xbf16>
    %29 = vector.shape_cast %28 : vector<1x4x18xbf16> to vector<4x18xbf16>
    %c0_21 = arith.constant 0 : index
    %c0_22 = arith.constant 0 : index
    %c0_23 = arith.constant 0 : index
    %30 = vector.load %arg2[%c0_21, %c0_22, %c0_23] : memref<3x8x4xbf16, #tpu.memory_space<vmem>>, vector<1x8x4xbf16>
    %31 = vector.shape_cast %30 : vector<1x8x4xbf16> to vector<8x4xbf16>
    %32 = vector.extract_strided_slice %29 {offsets = [0, 0], sizes = [4, 16], strides = [1, 1]} : vector<4x18xbf16> to vector<4x16xbf16>
    %cst_24 = arith.constant dense<0.000000e+00> : vector<8x16xf32>
    %33 = tpu.matmul %31, %32, %cst_24 {dimension_numbers = #tpu.dot_dimension_numbers<[1], [0], [0], [1], [0, 0, 1, 1], [], []>} : vector<8x4xbf16>, vector<4x16xbf16>, vector<8x16xf32> -> vector<8x16xf32>
    %c1_25 = arith.constant 1 : index
    %c0_26 = arith.constant 0 : index
    %c0_27 = arith.constant 0 : index
    %34 = vector.load %arg2[%c1_25, %c0_26, %c0_27] : memref<3x8x4xbf16, #tpu.memory_space<vmem>>, vector<1x8x4xbf16>
    %35 = vector.shape_cast %34 : vector<1x8x4xbf16> to vector<8x4xbf16>
    %36 = vector.extract_strided_slice %29 {offsets = [0, 1], sizes = [4, 16], strides = [1, 1]} : vector<4x18xbf16> to vector<4x16xbf16>
    %cst_28 = arith.constant dense<0.000000e+00> : vector<8x16xf32>
    %37 = tpu.matmul %35, %36, %cst_28 {dimension_numbers = #tpu.dot_dimension_numbers<[1], [0], [0], [1], [0, 0, 1, 1], [], []>} : vector<8x4xbf16>, vector<4x16xbf16>, vector<8x16xf32> -> vector<8x16xf32>
    %38 = arith.addf %33, %37 : vector<8x16xf32>
    %c2_29 = arith.constant 2 : index
    %c0_30 = arith.constant 0 : index
    %c0_31 = arith.constant 0 : index
    %39 = vector.load %arg2[%c2_29, %c0_30, %c0_31] : memref<3x8x4xbf16, #tpu.memory_space<vmem>>, vector<1x8x4xbf16>
    %40 = vector.shape_cast %39 : vector<1x8x4xbf16> to vector<8x4xbf16>
    %41 = vector.extract_strided_slice %29 {offsets = [0, 2], sizes = [4, 16], strides = [1, 1]} : vector<4x18xbf16> to vector<4x16xbf16>
    %cst_32 = arith.constant dense<0.000000e+00> : vector<8x16xf32>
    %42 = tpu.matmul %40, %41, %cst_32 {dimension_numbers = #tpu.dot_dimension_numbers<[1], [0], [0], [1], [0, 0, 1, 1], [], []>} : vector<8x4xbf16>, vector<4x16xbf16>, vector<8x16xf32> -> vector<8x16xf32>
    %43 = arith.addf %38, %42 : vector<8x16xf32>
    %c1_33 = arith.constant 1 : index
    %c0_34 = arith.constant 0 : index
    %c0_35 = arith.constant 0 : index
    %44 = vector.load %arg3[%c1_33, %c0_34, %c0_35] : memref<2x8x16xf32, #tpu.memory_space<vmem>>, vector<1x8x16xf32>
    %45 = vector.shape_cast %44 : vector<1x8x16xf32> to vector<8x16xf32>
    %46 = vector.shape_cast %43 : vector<8x16xf32> to vector<1x8x16xf32>
    tpu.vector_store %arg3[%c1_33, %c0_34, %c0_35], %46 {strides = array<i32>} : memref<2x8x16xf32, #tpu.memory_space<vmem>>, vector<1x8x16xf32>,
    %cst_36 = arith.constant dense<0.000000e+00> : vector<8xf32>
    %47 = vector.multi_reduction <add>, %43, %cst_36 [1] : vector<8x16xf32> to vector<8xf32>
    %48 = vector.shape_cast %47 : vector<8xf32> to vector<8x1xf32>
    %49 = arith.addf %23, %48 : vector<8x1xf32>
    %50 = arith.mulf %43, %43 : vector<8x16xf32>
    %cst_37 = arith.constant dense<0.000000e+00> : vector<8xf32>
    %51 = vector.multi_reduction <add>, %50, %cst_37 [1] : vector<8x16xf32> to vector<8xf32>
    %52 = vector.shape_cast %51 : vector<8xf32> to vector<8x1xf32>
    %53 = arith.addf %27, %52 : vector<8x1xf32>
    %c0_38 = arith.constant 0 : index
    %c0_39 = arith.constant 0 : index
    %c0_40 = arith.constant 0 : index
    %54 = vector.load %arg4[%c0_38, %c0_39, %c0_40] : memref<1x8x1xf32, #tpu.memory_space<vmem>>, vector<1x8x1xf32>
    %55 = vector.shape_cast %54 : vector<1x8x1xf32> to vector<8x1xf32>
    %56 = vector.shape_cast %49 : vector<8x1xf32> to vector<1x8x1xf32>
    tpu.vector_store %arg4[%c0_38, %c0_39, %c0_40], %56 {strides = array<i32>} : memref<1x8x1xf32, #tpu.memory_space<vmem>>, vector<1x8x1xf32>,
    %c0_41 = arith.constant 0 : index
    %c0_42 = arith.constant 0 : index
    %c0_43 = arith.constant 0 : index
    %57 = vector.load %arg5[%c0_41, %c0_42, %c0_43] : memref<1x8x1xf32, #tpu.memory_space<vmem>>, vector<1x8x1xf32>
    %58 = vector.shape_cast %57 : vector<1x8x1xf32> to vector<8x1xf32>
    %59 = vector.shape_cast %53 : vector<8x1xf32> to vector<1x8x1xf32>
    tpu.vector_store %arg5[%c0_41, %c0_42, %c0_43], %59 {strides = array<i32>} : memref<1x8x1xf32, #tpu.memory_space<vmem>>, vector<1x8x1xf32>,
    return
  }
  func.func @transform_0(%arg0: i32) -> (i32, i32, i32) {
    %c0_i32 = arith.constant 0 : i32
    %c0_i32_0 = arith.constant 0 : i32
    %c0_i32_1 = arith.constant 0 : i32
    return %arg0, %c0_i32, %c0_i32_0 : i32, i32, i32
  }
  func.func @transform_1(%arg0: i32) -> (i32, i32, i32) {
    %c0_i32 = arith.constant 0 : i32
    %c0_i32_0 = arith.constant 0 : i32
    %c0_i32_1 = arith.constant 0 : i32
    %c0_i32_2 = arith.constant 0 : i32
    return %c0_i32, %c0_i32_0, %c0_i32_1 : i32, i32, i32
  }
  func.func @transform_2(%arg0: i32) -> (i32, i32, i32) {
    %c0_i32 = arith.constant 0 : i32
    %c0_i32_0 = arith.constant 0 : i32
    %c0_i32_1 = arith.constant 0 : i32
    return %arg0, %c0_i32, %c0_i32_0 : i32, i32, i32
  }
  func.func @transform_3(%arg0: i32) -> (i32, i32, i32) {
    %c0_i32 = arith.constant 0 : i32
    %c0_i32_0 = arith.constant 0 : i32
    %c0_i32_1 = arith.constant 0 : i32
    return %arg0, %c0_i32, %c0_i32_0 : i32, i32, i32
  }
  func.func @transform_4(%arg0: i32) -> (i32, i32, i32) {
    %c0_i32 = arith.constant 0 : i32
    %c0_i32_0 = arith.constant 0 : i32
    %c0_i32_1 = arith.constant 0 : i32
    return %arg0, %c0_i32, %c0_i32_0 : i32, i32, i32
  }
}

module attributes {stable_mosaic.version = 11 : i64} {
  func.func @_pass1_kernel(%arg0: i32, %arg1: memref<2x4x18xbf16, #tpu.memory_space<vmem>>, %arg2: memref<3x8x4xbf16, #tpu.memory_space<vmem>>, %arg3: memref<2x8x16xf32, #tpu.memory_space<vmem>>, %arg4: memref<1x8x1xf32, #tpu.memory_space<vmem>>, %arg5: memref<1x8x1xf32, #tpu.memory_space<vmem>>) attributes {dimension_semantics = [#tpu.dimension_semantics<parallel>], iteration_bounds = array<i64: 1>, scalar_prefetch = 0 : i64, scratch_operands = 0 : i64, tpu.core_type = #tpu.core_type<tc>, window_params = [{transform_indices = @transform_0, window_bounds = array<i64: 2, 4, 18>}, {pipeline_mode = #tpu.pipeline_mode<synchronous>, transform_indices = @transform_1, window_bounds = array<i64: 3, 8, 4>}, {transform_indices = @transform_2, window_bounds = array<i64: 2, 8, 16>}, {transform_indices = @transform_3, window_bounds = array<i64: 1, 8, 1>}, {transform_indices = @transform_4, window_bounds = array<i64: 1, 8, 1>}]} {
    %cst = arith.constant 0.000000e+00 : f32
    %0 = vector.broadcast %cst : f32 to vector<8x1xf32>
    %cst_0 = arith.constant 0.000000e+00 : f32
    %1 = vector.broadcast %cst_0 : f32 to vector<8x1xf32>
    %c0 = arith.constant 0 : index
    %c0_1 = arith.constant 0 : index
    %c0_2 = arith.constant 0 : index
    %2 = vector.load %arg1[%c0, %c0_1, %c0_2] : memref<2x4x18xbf16, #tpu.memory_space<vmem>>, vector<1x4x18xbf16>
    %3 = vector.shape_cast %2 : vector<1x4x18xbf16> to vector<4x18xbf16>
    %c0_3 = arith.constant 0 : index
    %c0_4 = arith.constant 0 : index
    %c0_5 = arith.constant 0 : index
    %4 = vector.load %arg2[%c0_3, %c0_4, %c0_5] : memref<3x8x4xbf16, #tpu.memory_space<vmem>>, vector<1x8x4xbf16>
    %5 = vector.shape_cast %4 : vector<1x8x4xbf16> to vector<8x4xbf16>
    %6 = vector.extract_strided_slice %3 {offsets = [0, 0], sizes = [4, 16], strides = [1, 1]} : vector<4x18xbf16> to vector<4x16xbf16>
    %cst_6 = arith.constant dense<0.000000e+00> : vector<8x16xf32>
    %7 = tpu.matmul %5, %6, %cst_6 {dimension_numbers = #tpu.dot_dimension_numbers<[1], [0], [0], [1], [0, 0, 1, 1], [], []>} : vector<8x4xbf16>, vector<4x16xbf16>, vector<8x16xf32> -> vector<8x16xf32>
    %c1 = arith.constant 1 : index
    %c0_7 = arith.constant 0 : index
    %c0_8 = arith.constant 0 : index
    %8 = vector.load %arg2[%c1, %c0_7, %c0_8] : memref<3x8x4xbf16, #tpu.memory_space<vmem>>, vector<1x8x4xbf16>
    %9 = vector.shape_cast %8 : vector<1x8x4xbf16> to vector<8x4xbf16>
    %10 = vector.extract_strided_slice %3 {offsets = [0, 1], sizes = [4, 16], strides = [1, 1]} : vector<4x18xbf16> to vector<4x16xbf16>
    %cst_9 = arith.constant dense<0.000000e+00> : vector<8x16xf32>
    %11 = tpu.matmul %9, %10, %cst_9 {dimension_numbers = #tpu.dot_dimension_numbers<[1], [0], [0], [1], [0, 0, 1, 1], [], []>} : vector<8x4xbf16>, vector<4x16xbf16>, vector<8x16xf32> -> vector<8x16xf32>
    %12 = arith.addf %7, %11 : vector<8x16xf32>
    %c2 = arith.constant 2 : index
    %c0_10 = arith.constant 0 : index
    %c0_11 = arith.constant 0 : index
    %13 = vector.load %arg2[%c2, %c0_10, %c0_11] : memref<3x8x4xbf16, #tpu.memory_space<vmem>>, vector<1x8x4xbf16>
    %14 = vector.shape_cast %13 : vector<1x8x4xbf16> to vector<8x4xbf16>
    %15 = vector.extract_strided_slice %3 {offsets = [0, 2], sizes = [4, 16], strides = [1, 1]} : vector<4x18xbf16> to vector<4x16xbf16>
    %cst_12 = arith.constant dense<0.000000e+00> : vector<8x16xf32>
    %16 = tpu.matmul %14, %15, %cst_12 {dimension_numbers = #tpu.dot_dimension_numbers<[1], [0], [0], [1], [0, 0, 1, 1], [], []>} : vector<8x4xbf16>, vector<4x16xbf16>, vector<8x16xf32> -> vector<8x16xf32>
    %17 = arith.addf %12, %16 : vector<8x16xf32>
    %c0_13 = arith.constant 0 : index
    %c0_14 = arith.constant 0 : index
    %c0_15 = arith.constant 0 : index
    %18 = vector.load %arg3[%c0_13, %c0_14, %c0_15] : memref<2x8x16xf32, #tpu.memory_space<vmem>>, vector<1x8x16xf32>
    %19 = vector.shape_cast %18 : vector<1x8x16xf32> to vector<8x16xf32>
    %20 = vector.shape_cast %17 : vector<8x16xf32> to vector<1x8x16xf32>
    tpu.vector_store %arg3[%c0_13, %c0_14, %c0_15], %20 {strides = array<i32>} : memref<2x8x16xf32, #tpu.memory_space<vmem>>, vector<1x8x16xf32>,
    %cst_16 = arith.constant dense<0.000000e+00> : vector<8xf32>
    %21 = vector.multi_reduction <add>, %17, %cst_16 [1] : vector<8x16xf32> to vector<8xf32>
    %22 = vector.shape_cast %21 : vector<8xf32> to vector<8x1xf32>
    %23 = arith.addf %0, %22 : vector<8x1xf32>
    %24 = arith.mulf %17, %17 : vector<8x16xf32>
    %cst_17 = arith.constant dense<0.000000e+00> : vector<8xf32>
    %25 = vector.multi_reduction <add>, %24, %cst_17 [1] : vector<8x16xf32> to vector<8xf32>
    %26 = vector.shape_cast %25 : vector<8xf32> to vector<8x1xf32>
    %27 = arith.addf %1, %26 : vector<8x1xf32>
    %c1_18 = arith.constant 1 : index
    %c0_19 = arith.constant 0 : index
    %c0_20 = arith.constant 0 : index
    %28 = vector.load %arg1[%c1_18, %c0_19, %c0_20] : memref<2x4x18xbf16, #tpu.memory_space<vmem>>, vector<1x4x18xbf16>
    %29 = vector.shape_cast %28 : vector<1x4x18xbf16> to vector<4x18xbf16>
    %c0_21 = arith.constant 0 : index
    %c0_22 = arith.constant 0 : index
    %c0_23 = arith.constant 0 : index
    %30 = vector.load %arg2[%c0_21, %c0_22, %c0_23] : memref<3x8x4xbf16, #tpu.memory_space<vmem>>, vector<1x8x4xbf16>
    %31 = vector.shape_cast %30 : vector<1x8x4xbf16> to vector<8x4xbf16>
    %32 = vector.extract_strided_slice %29 {offsets = [0, 0], sizes = [4, 16], strides = [1, 1]} : vector<4x18xbf16> to vector<4x16xbf16>
    %cst_24 = arith.constant dense<0.000000e+00> : vector<8x16xf32>
    %33 = tpu.matmul %31, %32, %cst_24 {dimension_numbers = #tpu.dot_dimension_numbers<[1], [0], [0], [1], [0, 0, 1, 1], [], []>} : vector<8x4xbf16>, vector<4x16xbf16>, vector<8x16xf32> -> vector<8x16xf32>
    %c1_25 = arith.constant 1 : index
    %c0_26 = arith.constant 0 : index
    %c0_27 = arith.constant 0 : index
    %34 = vector.load %arg2[%c1_25, %c0_26, %c0_27] : memref<3x8x4xbf16, #tpu.memory_space<vmem>>, vector<1x8x4xbf16>
    %35 = vector.shape_cast %34 : vector<1x8x4xbf16> to vector<8x4xbf16>
    %36 = vector.extract_strided_slice %29 {offsets = [0, 1], sizes = [4, 16], strides = [1, 1]} : vector<4x18xbf16> to vector<4x16xbf16>
    %cst_28 = arith.constant dense<0.000000e+00> : vector<8x16xf32>
    %37 = tpu.matmul %35, %36, %cst_28 {dimension_numbers = #tpu.dot_dimension_numbers<[1], [0], [0], [1], [0, 0, 1, 1], [], []>} : vector<8x4xbf16>, vector<4x16xbf16>, vector<8x16xf32> -> vector<8x16xf32>
    %38 = arith.addf %33, %37 : vector<8x16xf32>
    %c2_29 = arith.constant 2 : index
    %c0_30 = arith.constant 0 : index
    %c0_31 = arith.constant 0 : index
    %39 = vector.load %arg2[%c2_29, %c0_30, %c0_31] : memref<3x8x4xbf16, #tpu.memory_space<vmem>>, vector<1x8x4xbf16>
    %40 = vector.shape_cast %39 : vector<1x8x4xbf16> to vector<8x4xbf16>
    %41 = vector.extract_strided_slice %29 {offsets = [0, 2], sizes = [4, 16], strides = [1, 1]} : vector<4x18xbf16> to vector<4x16xbf16>
    %cst_32 = arith.constant dense<0.000000e+00> : vector<8x16xf32>
    %42 = tpu.matmul %40, %41, %cst_32 {dimension_numbers = #tpu.dot_dimension_numbers<[1], [0], [0], [1], [0, 0, 1, 1], [], []>} : vector<8x4xbf16>, vector<4x16xbf16>, vector<8x16xf32> -> vector<8x16xf32>
    %43 = arith.addf %38, %42 : vector<8x16xf32>
    %c1_33 = arith.constant 1 : index
    %c0_34 = arith.constant 0 : index
    %c0_35 = arith.constant 0 : index
    %44 = vector.load %arg3[%c1_33, %c0_34, %c0_35] : memref<2x8x16xf32, #tpu.memory_space<vmem>>, vector<1x8x16xf32>
    %45 = vector.shape_cast %44 : vector<1x8x16xf32> to vector<8x16xf32>
    %46 = vector.shape_cast %43 : vector<8x16xf32> to vector<1x8x16xf32>
    tpu.vector_store %arg3[%c1_33, %c0_34, %c0_35], %46 {strides = array<i32>} : memref<2x8x16xf32, #tpu.memory_space<vmem>>, vector<1x8x16xf32>,
    %cst_36 = arith.constant dense<0.000000e+00> : vector<8xf32>
    %47 = vector.multi_reduction <add>, %43, %cst_36 [1] : vector<8x16xf32> to vector<8xf32>
    %48 = vector.shape_cast %47 : vector<8xf32> to vector<8x1xf32>
    %49 = arith.addf %23, %48 : vector<8x1xf32>
    %50 = arith.mulf %43, %43 : vector<8x16xf32>
    %cst_37 = arith.constant dense<0.000000e+00> : vector<8xf32>
    %51 = vector.multi_reduction <add>, %50, %cst_37 [1] : vector<8x16xf32> to vector<8xf32>
    %52 = vector.shape_cast %51 : vector<8xf32> to vector<8x1xf32>
    %53 = arith.addf %27, %52 : vector<8x1xf32>
    %c0_38 = arith.constant 0 : index
    %c0_39 = arith.constant 0 : index
    %c0_40 = arith.constant 0 : index
    %54 = vector.load %arg4[%c0_38, %c0_39, %c0_40] : memref<1x8x1xf32, #tpu.memory_space<vmem>>, vector<1x8x1xf32>
    %55 = vector.shape_cast %54 : vector<1x8x1xf32> to vector<8x1xf32>
    %56 = vector.shape_cast %49 : vector<8x1xf32> to vector<1x8x1xf32>
    tpu.vector_store %arg4[%c0_38, %c0_39, %c0_40], %56 {strides = array<i32>} : memref<1x8x1xf32, #tpu.memory_space<vmem>>, vector<1x8x1xf32>,
    %c0_41 = arith.constant 0 : index
    %c0_42 = arith.constant 0 : index
    %c0_43 = arith.constant 0 : index
    %57 = vector.load %arg5[%c0_41, %c0_42, %c0_43] : memref<1x8x1xf32, #tpu.memory_space<vmem>>, vector<1x8x1xf32>
    %58 = vector.shape_cast %57 : vector<1x8x1xf32> to vector<8x1xf32>
    %59 = vector.shape_cast %53 : vector<8x1xf32> to vector<1x8x1xf32>
    tpu.vector_store %arg5[%c0_41, %c0_42, %c0_43], %59 {strides = array<i32>} : memref<1x8x1xf32, #tpu.memory_space<vmem>>, vector<1x8x1xf32>,
    return
  }
  func.func @transform_0(%arg0: i32) -> (i32, i32, i32) {
    %c0_i32 = arith.constant 0 : i32
    %c0_i32_0 = arith.constant 0 : i32
    %c0_i32_1 = arith.constant 0 : i32
    return %arg0, %c0_i32, %c0_i32_0 : i32, i32, i32
  }
  func.func @transform_1(%arg0: i32) -> (i32, i32, i32) {
    %c0_i32 = arith.constant 0 : i32
    %c0_i32_0 = arith.constant 0 : i32
    %c0_i32_1 = arith.constant 0 : i32
    %c0_i32_2 = arith.constant 0 : i32
    return %c0_i32, %c0_i32_0, %c0_i32_1 : i32, i32, i32
  }
  func.func @transform_2(%arg0: i32) -> (i32, i32, i32) {
    %c0_i32 = arith.constant 0 : i32
    %c0_i32_0 = arith.constant 0 : i32
    %c0_i32_1 = arith.constant 0 : i32
    return %arg0, %c0_i32, %c0_i32_0 : i32, i32, i32
  }
  func.func @transform_3(%arg0: i32) -> (i32, i32, i32) {
    %c0_i32 = arith.constant 0 : i32
    %c0_i32_0 = arith.constant 0 : i32
    %c0_i32_1 = arith.constant 0 : i32
    return %arg0, %c0_i32, %c0_i32_0 : i32, i32, i32
  }
  func.func @transform_4(%arg0: i32) -> (i32, i32, i32) {
    %c0_i32 = arith.constant 0 : i32
    %c0_i32_0 = arith.constant 0 : i32
    %c0_i32_1 = arith.constant 0 : i32
    return %arg0, %c0_i32, %c0_i32_0 : i32, i32, i32
  }
}

</mosaic_0001>

<llo_original>
// kernel: tpu_custom_call.1
$region0: #{tpu_custom_call.1}
  #allocation0 [shape = 'u32[]', space=smem, size = 0x4, offset = 0x4, fixed_abs, tag = 'smem constant byte address 0x4 - core index']
  #allocation1 [shape = 'u32[72,128]{1,0:T(1,128)}', space=vmem, size = 0x9000, scoped, tag = 'internal scratch']
  %s0 = inlined_call_operand.vmem [shape: bf16[2,4,18], index: 0, kind: input, shape index: {}]
  %s1 = inlined_call_operand.vmem [shape: bf16[3,8,4], index: 1, kind: input, shape index: {}]
  %s2 = inlined_call_operand.hbm [shape: f32[2,8,16], index: 2, kind: output, shape index: {0}]
  %s3 = inlined_call_operand.vmem [shape: f32[1,8,1], index: 3, kind: output, shape index: {1}]
  %s4 = inlined_call_operand.vmem [shape: f32[1,8,1], index: 4, kind: output, shape index: {2}]
  %5 = xla_tuple %s2, %s3, %s4
  %s6 = sld [smem:[#allocation0]]
  $region34: #{tpu_custom_call.1} parent=0
    _
  %s8 = ssub.s32 1, %s6
  %s9 = scalar_select 0, %s8, %s6
  $region1: #{tpu_custom_call.1} parent=0
    #allocation2 [shape = 'u8[8192]{0}', space=vmem, size = 0x2000, scoped, tag = 'output window, operand 0, single buffered']
    #allocation3 [shape = 's32[1]{0}', space=sflag, size = 0x4, scoped, tag = 'scoped memory for tpu_custom_call.1']
    %10 = vsyncpa [#allocation3], 0
    // Predicated region
    $region2: #{tpu_custom_call.1} parent=1 // pred_check
      _
    $region3: #{tpu_custom_call.1} parent=1 // pred_check_branch
      %12 = sbr.rel (0) target = $region5
    $region4: #{tpu_custom_call.1} parent=1 // pred_region
      _
    $region5: #{tpu_custom_call.1} parent=1 // pred_fallthru
      _
    // Predicated region
    $region6: #{tpu_custom_call.1} parent=1 // pred_check
      _
    $region7: #{tpu_custom_call.1} parent=1 // pred_check_branch
      %14 = sbr.rel (0) target = $region9
    $region8: #{tpu_custom_call.1} parent=1 // pred_region
      _
    $region9: #{tpu_custom_call.1} parent=1 // pred_fallthru
      _
    %v16 = vld [vmem:[%s0] sm:$0x3]
    %v17 = vld [vmem:[%s1] sm:$0xf]
    %s18 = scalar_lea.vmem %s1, 4
    %v19 = vld [vmem:[%s18] sm:$0xf]
    %21 = vst [vmem:[#allocation1] ss:$4 sm:$0xff] %v16
    %v22 = vld.sshfl [vmem:[#allocation1] sm:$0xff pattern:$0x73625140]
    %24 = vrot.lane.b32.xlu0 %v22, 127
    %v25 = vpop.permute.xlu0 %24
    %vm26 = vcmask 31744
    %v28 = vsel %vm26, %v19, 0
    %vm30 = vcmask 1041408
    %v32 = vsel %vm30, %v25, 0
    %34 = vmatpush.bf16.msra.mxu0 0
    %35 = vmatpush.bf16.msra.mxu0 0
    %36 = vmatpush.bf16.msra.mxu0 0
    %37 = vmatpush.bf16.msra.mxu0 0
    %38 = vmatpush.bf16.msra.mxu0 0
    %39 = vmatpush.bf16.msra.mxu0 0
    %40 = vmatpush.bf16.msra.mxu0 0
    %41 = vmatpush.bf16.msra.mxu0 %v32
    %42 = vmatmul.bf16.gmra.mxu0 %v28
    %v43 = vpop.f32.mrf.mxu0
    %v44 = vadd.f32 0.0, %v43
    %v45 = vpop.f32.mrf.mxu0
    %46 = vdwg.mxu0
    %v48 = vsel %vm26, %v17, 0
    %v50 = vsel %vm30, %v16, 0
    %52 = vmatpush.bf16.msra.mxu0 0
    %53 = vmatpush.bf16.msra.mxu0 0
    %54 = vmatpush.bf16.msra.mxu0 0
    %55 = vmatpush.bf16.msra.mxu0 0
    %56 = vmatpush.bf16.msra.mxu0 0
    %57 = vmatpush.bf16.msra.mxu0 0
    %58 = vmatpush.bf16.msra.mxu0 0
    %59 = vmatpush.bf16.msra.mxu0 %v50
    %60 = vmatmul.bf16.gmra.mxu0 %v48
    %v61 = vpop.f32.mrf.mxu0
    %v62 = vadd.f32 %v44, %v61
    %v63 = vpop.f32.mrf.mxu0
    %64 = vdwg.mxu0
    %s65 = scalar_lea.vmem %s1, 8
    %v66 = vld [vmem:[%s65] sm:$0xf]
    %67 = vst [vmem:[#allocation1] ss:$4 sm:$0xff] %v16
    %v68 = vld.sshfl [vmem:[#allocation1] sm:$0xff pattern:$0x73625140]
    %70 = vrot.lane.b32.xlu0 %v68, 126
    %v71 = vpop.permute.xlu0 %70
    %v73 = vsel %vm26, %v66, 0
    %v76 = vsel %vm30, %v71, 0
    %78 = vmatpush.bf16.msra.mxu0 0
    %79 = vmatpush.bf16.msra.mxu0 0
    %80 = vmatpush.bf16.msra.mxu0 0
    %81 = vmatpush.bf16.msra.mxu0 0
    %82 = vmatpush.bf16.msra.mxu0 0
    %83 = vmatpush.bf16.msra.mxu0 0
    %84 = vmatpush.bf16.msra.mxu0 0
    %85 = vmatpush.bf16.msra.mxu0 %v76
    %86 = vmatmul.bf16.gmra.mxu0 %v73
    %v87 = vpop.f32.mrf.mxu0
    %v88 = vadd.f32 0.0, %v87
    %v89 = vpop.f32.mrf.mxu0
    %90 = vdwg.mxu0
    %v91 = vadd.f32 %v62, %v88
    %vm92 = vcmask 130048
    %93 = vst.msk [vmem:[#allocation2] sm:$0xff] %vm92, %v91
    %v94 = vsel %vm92, %v91, 0.0
    %95 = vadd.xlane.f32.xlu0 %v94
    %v96 = vpop.xlane.xlu0 %95
    %v97 = vadd.f32 %v96, 0.0
    %v98 = vmul.f32 %v91, %v91
    %v99 = vsel %vm92, %v98, 0.0
    %100 = vadd.xlane.f32.xlu0 %v99
    %v101 = vpop.xlane.xlu0 %100
    %v102 = vadd.f32 %v101, 0.0
    %s103 = scalar_lea.vmem %s0, 2
    %v104 = vld [vmem:[%s103] sm:$0x3]
    %v105 = vld [vmem:[%s1] sm:$0xf]
    %v106 = vld [vmem:[%s18] sm:$0xf]
    %108 = vst [vmem:[#allocation1] ss:$4 sm:$0xff] %v104
    %v109 = vld.sshfl [vmem:[#allocation1] sm:$0xff pattern:$0x73625140]
    %111 = vrot.lane.b32.xlu0 %v109, 127
    %v112 = vpop.permute.xlu0 %111
    %v114 = vsel %vm26, %v106, 0
    %v117 = vsel %vm30, %v112, 0
    %119 = vmatpush.bf16.msra.mxu0 0
    %120 = vmatpush.bf16.msra.mxu0 0
    %121 = vmatpush.bf16.msra.mxu0 0
    %122 = vmatpush.bf16.msra.mxu0 0
    %123 = vmatpush.bf16.msra.mxu0 0
    %124 = vmatpush.bf16.msra.mxu0 0
    %125 = vmatpush.bf16.msra.mxu0 0
    %126 = vmatpush.bf16.msra.mxu0 %v117
    %127 = vmatmul.bf16.gmra.mxu0 %v114
    %v128 = vpop.f32.mrf.mxu0
    %v129 = vadd.f32 0.0, %v128
    %v130 = vpop.f32.mrf.mxu0
    %131 = vdwg.mxu0
    %v133 = vsel %vm26, %v105, 0
    %v135 = vsel %vm30, %v104, 0
    %137 = vmatpush.bf16.msra.mxu0 0
    %138 = vmatpush.bf16.msra.mxu0 0
    %139 = vmatpush.bf16.msra.mxu0 0
    %140 = vmatpush.bf16.msra.mxu0 0
    %141 = vmatpush.bf16.msra.mxu0 0
    %142 = vmatpush.bf16.msra.mxu0 0
    %143 = vmatpush.bf16.msra.mxu0 0
    %144 = vmatpush.bf16.msra.mxu0 %v135
    %145 = vmatmul.bf16.gmra.mxu0 %v133
    %v146 = vpop.f32.mrf.mxu0
    %v147 = vadd.f32 %v129, %v146
    %v148 = vpop.f32.mrf.mxu0
    %149 = vdwg.mxu0
    %v150 = vld [vmem:[%s65] sm:$0xf]
    %151 = vst [vmem:[#allocation1] ss:$4 sm:$0xff] %v104
    %v152 = vld.sshfl [vmem:[#allocation1] sm:$0xff pattern:$0x73625140]
    %154 = vrot.lane.b32.xlu0 %v152, 126
    %v155 = vpop.permute.xlu0 %154
    %v157 = vsel %vm26, %v150, 0
    %v160 = vsel %vm30, %v155, 0
    %162 = vmatpush.bf16.msra.mxu0 0
    %163 = vmatpush.bf16.msra.mxu0 0
    %164 = vmatpush.bf16.msra.mxu0 0
    %165 = vmatpush.bf16.msra.mxu0 0
    %166 = vmatpush.bf16.msra.mxu0 0
    %167 = vmatpush.bf16.msra.mxu0 0
    %168 = vmatpush.bf16.msra.mxu0 0
    %169 = vmatpush.bf16.msra.mxu0 %v160
    %170 = vmatmul.bf16.gmra.mxu0 %v157
    %v171 = vpop.f32.mrf.mxu0
    %v172 = vadd.f32 0.0, %v171
    %v173 = vpop.f32.mrf.mxu0
    %174 = vdwg.mxu0
    %v175 = vadd.f32 %v147, %v172
    %s176 = scalar_lea.vmem [#allocation2], 8
    %177 = vst.msk [vmem:[%s176] sm:$0xff] %vm92, %v175
    %v178 = vsel %vm92, %v175, 0.0
    %179 = vadd.xlane.f32.xlu0 %v178
    %v180 = vpop.xlane.xlu0 %179
    %v181 = vadd.f32 %v97, %v180
    %v182 = vmul.f32 %v175, %v175
    %v183 = vsel %vm92, %v182, 0.0
    %184 = vadd.xlane.f32.xlu0 %v183
    %v185 = vpop.xlane.xlu0 %184
    %v186 = vadd.f32 %v102, %v185
    %vm187 = vcmask 7168
    %188 = vst.msk [vmem:[%s3] sm:$0xff] %vm187, %v181
    %189 = vst.msk [vmem:[%s4] sm:$0xff] %vm187, %v186
    // Predicated region
    $region10: #{tpu_custom_call.1} parent=1 // pred_check
      _
    $region11: #{tpu_custom_call.1} parent=1 // pred_check_branch
      %191 = sbr.rel (0) target = $region13
    $region12: #{tpu_custom_call.1} parent=1 // pred_region
      %193 = vsyncadd [#allocation3], 0
      %s194 = sshll.u32 [#allocation2], 4
      %s195 = int_to_ptr.vmem [resolvable:$true] %s194
      %s196 = sshll.u32 %s2, 4
      %s197 = int_to_ptr.hbm [resolvable:$true] %s196
      %202 = dma.vmem_to_hbm [thread:$0]  %s195, 256, %s197, [#allocation3], 128, 128, 8
    $region13: #{tpu_custom_call.1} parent=1 // pred_fallthru
      _
    // Predicated region
    $region14: #{tpu_custom_call.1} parent=1 // pred_check
      _
    $region15: #{tpu_custom_call.1} parent=1 // pred_check_branch
      %204 = sbr.rel (0) target = $region17
    $region16: #{tpu_custom_call.1} parent=1 // pred_region
      _
    $region17: #{tpu_custom_call.1} parent=1 // pred_fallthru
      _
    // Predicated region
    $region18: #{tpu_custom_call.1} parent=1 // pred_check
      _
    $region19: #{tpu_custom_call.1} parent=1 // pred_check_branch
      %206 = sbr.rel (0) target = $region21
    $region20: #{tpu_custom_call.1} parent=1 // pred_region
      _
    $region21: #{tpu_custom_call.1} parent=1 // pred_fallthru
      _
    // Predicated region
    $region22: #{tpu_custom_call.1} parent=1 // pred_check
      _
    $region23: #{tpu_custom_call.1} parent=1 // pred_check_branch
      %208 = sbr.rel (0) target = $region25
    $region24: #{tpu_custom_call.1} parent=1 // pred_region
      %210 = dma.done [#allocation3], 256
    $region25: #{tpu_custom_call.1} parent=1 // pred_fallthru
      _
    // Predicated region
    $region26: #{tpu_custom_call.1} parent=1 // pred_check
      _
    $region27: #{tpu_custom_call.1} parent=1 // pred_check_branch
      %212 = sbr.rel (0) target = $region29
    $region28: #{tpu_custom_call.1} parent=1 // pred_region
      _
    $region29: #{tpu_custom_call.1} parent=1 // pred_fallthru
      _
    // Predicated region
    $region30: #{tpu_custom_call.1} parent=1 // pred_check
      _
    $region31: #{tpu_custom_call.1} parent=1 // pred_check_branch
      %214 = sbr.rel (0) target = $region33
    $region32: #{tpu_custom_call.1} parent=1 // pred_region
      _
    $region33: #{tpu_custom_call.1} parent=1 // pred_fallthru
      _
    %215 = vsyncpa [#allocation3], 1

// kernel: tpu_custom_call.1
$region0: #{tpu_custom_call.1}
  #allocation0 [shape = 'u32[]', space=smem, size = 0x4, offset = 0x4, fixed_abs, tag = 'smem constant byte address 0x4 - core index']
  #allocation1 [shape = 'u32[72,128]{1,0:T(1,128)}', space=vmem, size = 0x9000, scoped, tag = 'internal scratch']
  %s0 = inlined_call_operand.vmem [shape: bf16[2,4,18], index: 0, kind: input, shape index: {}]
  %s1 = inlined_call_operand.vmem [shape: bf16[3,8,4], index: 1, kind: input, shape index: {}]
  %s2 = inlined_call_operand.hbm [shape: f32[2,8,16], index: 2, kind: output, shape index: {0}]
  %s3 = inlined_call_operand.vmem [shape: f32[1,8,1], index: 3, kind: output, shape index: {1}]
  %s4 = inlined_call_operand.vmem [shape: f32[1,8,1], index: 4, kind: output, shape index: {2}]
  %5 = xla_tuple %s2, %s3, %s4
  %s6 = sld [smem:[#allocation0]]
  $region34: #{tpu_custom_call.1} parent=0
    _
  %s8 = ssub.s32 1, %s6
  %s9 = scalar_select 0, %s8, %s6
  $region1: #{tpu_custom_call.1} parent=0
    #allocation2 [shape = 'u8[8192]{0}', space=vmem, size = 0x2000, scoped, tag = 'output window, operand 0, single buffered']
    #allocation3 [shape = 's32[1]{0}', space=sflag, size = 0x4, scoped, tag = 'scoped memory for tpu_custom_call.1']
    %10 = vsyncpa [#allocation3], 0
    // Predicated region
    $region2: #{tpu_custom_call.1} parent=1 // pred_check
      _
    $region3: #{tpu_custom_call.1} parent=1 // pred_check_branch
      %12 = sbr.rel (0) target = $region5
    $region4: #{tpu_custom_call.1} parent=1 // pred_region
      _
    $region5: #{tpu_custom_call.1} parent=1 // pred_fallthru
      _
    // Predicated region
    $region6: #{tpu_custom_call.1} parent=1 // pred_check
      _
    $region7: #{tpu_custom_call.1} parent=1 // pred_check_branch
      %14 = sbr.rel (0) target = $region9
    $region8: #{tpu_custom_call.1} parent=1 // pred_region
      _
    $region9: #{tpu_custom_call.1} parent=1 // pred_fallthru
      _
    %v16 = vld [vmem:[%s0] sm:$0x3]
    %v17 = vld [vmem:[%s1] sm:$0xf]
    %s18 = scalar_lea.vmem %s1, 4
    %v19 = vld [vmem:[%s18] sm:$0xf]
    %21 = vst [vmem:[#allocation1] ss:$4 sm:$0xff] %v16
    %v22 = vld.sshfl [vmem:[#allocation1] sm:$0xff pattern:$0x73625140]
    %24 = vrot.lane.b32.xlu0 %v22, 127
    %v25 = vpop.permute.xlu0 %24
    %vm26 = vcmask 31744
    %v28 = vsel %vm26, %v19, 0
    %vm30 = vcmask 1041408
    %v32 = vsel %vm30, %v25, 0
    %34 = vmatpush.bf16.msra.mxu0 0
    %35 = vmatpush.bf16.msra.mxu0 0
    %36 = vmatpush.bf16.msra.mxu0 0
    %37 = vmatpush.bf16.msra.mxu0 0
    %38 = vmatpush.bf16.msra.mxu0 0
    %39 = vmatpush.bf16.msra.mxu0 0
    %40 = vmatpush.bf16.msra.mxu0 0
    %41 = vmatpush.bf16.msra.mxu0 %v32
    %42 = vmatmul.bf16.gmra.mxu0 %v28
    %v43 = vpop.f32.mrf.mxu0
    %v44 = vadd.f32 0.0, %v43
    %v45 = vpop.f32.mrf.mxu0
    %46 = vdwg.mxu0
    %v48 = vsel %vm26, %v17, 0
    %v50 = vsel %vm30, %v16, 0
    %52 = vmatpush.bf16.msra.mxu0 0
    %53 = vmatpush.bf16.msra.mxu0 0
    %54 = vmatpush.bf16.msra.mxu0 0
    %55 = vmatpush.bf16.msra.mxu0 0
    %56 = vmatpush.bf16.msra.mxu0 0
    %57 = vmatpush.bf16.msra.mxu0 0
    %58 = vmatpush.bf16.msra.mxu0 0
    %59 = vmatpush.bf16.msra.mxu0 %v50
    %60 = vmatmul.bf16.gmra.mxu0 %v48
    %v61 = vpop.f32.mrf.mxu0
    %v62 = vadd.f32 %v44, %v61
    %v63 = vpop.f32.mrf.mxu0
    %64 = vdwg.mxu0
    %s65 = scalar_lea.vmem %s1, 8
    %v66 = vld [vmem:[%s65] sm:$0xf]
    %67 = vst [vmem:[#allocation1] ss:$4 sm:$0xff] %v16
    %v68 = vld.sshfl [vmem:[#allocation1] sm:$0xff pattern:$0x73625140]
    %70 = vrot.lane.b32.xlu0 %v68, 126
    %v71 = vpop.permute.xlu0 %70
    %v73 = vsel %vm26, %v66, 0
    %v76 = vsel %vm30, %v71, 0
    %78 = vmatpush.bf16.msra.mxu0 0
    %79 = vmatpush.bf16.msra.mxu0 0
    %80 = vmatpush.bf16.msra.mxu0 0
    %81 = vmatpush.bf16.msra.mxu0 0
    %82 = vmatpush.bf16.msra.mxu0 0
    %83 = vmatpush.bf16.msra.mxu0 0
    %84 = vmatpush.bf16.msra.mxu0 0
    %85 = vmatpush.bf16.msra.mxu0 %v76
    %86 = vmatmul.bf16.gmra.mxu0 %v73
    %v87 = vpop.f32.mrf.mxu0
    %v88 = vadd.f32 0.0, %v87
    %v89 = vpop.f32.mrf.mxu0
    %90 = vdwg.mxu0
    %v91 = vadd.f32 %v62, %v88
    %vm92 = vcmask 130048
    %93 = vst.msk [vmem:[#allocation2] sm:$0xff] %vm92, %v91
    %v94 = vsel %vm92, %v91, 0.0
    %95 = vadd.xlane.f32.xlu0 %v94
    %v96 = vpop.xlane.xlu0 %95
    %v97 = vadd.f32 %v96, 0.0
    %v98 = vmul.f32 %v91, %v91
    %v99 = vsel %vm92, %v98, 0.0
    %100 = vadd.xlane.f32.xlu0 %v99
    %v101 = vpop.xlane.xlu0 %100
    %v102 = vadd.f32 %v101, 0.0
    %s103 = scalar_lea.vmem %s0, 2
    %v104 = vld [vmem:[%s103] sm:$0x3]
    %v105 = vld [vmem:[%s1] sm:$0xf]
    %v106 = vld [vmem:[%s18] sm:$0xf]
    %108 = vst [vmem:[#allocation1] ss:$4 sm:$0xff] %v104
    %v109 = vld.sshfl [vmem:[#allocation1] sm:$0xff pattern:$0x73625140]
    %111 = vrot.lane.b32.xlu0 %v109, 127
    %v112 = vpop.permute.xlu0 %111
    %v114 = vsel %vm26, %v106, 0
    %v117 = vsel %vm30, %v112, 0
    %119 = vmatpush.bf16.msra.mxu0 0
    %120 = vmatpush.bf16.msra.mxu0 0
    %121 = vmatpush.bf16.msra.mxu0 0
    %122 = vmatpush.bf16.msra.mxu0 0
    %123 = vmatpush.bf16.msra.mxu0 0
    %124 = vmatpush.bf16.msra.mxu0 0
    %125 = vmatpush.bf16.msra.mxu0 0
    %126 = vmatpush.bf16.msra.mxu0 %v117
    %127 = vmatmul.bf16.gmra.mxu0 %v114
    %v128 = vpop.f32.mrf.mxu0
    %v129 = vadd.f32 0.0, %v128
    %v130 = vpop.f32.mrf.mxu0
    %131 = vdwg.mxu0
    %v133 = vsel %vm26, %v105, 0
    %v135 = vsel %vm30, %v104, 0
    %137 = vmatpush.bf16.msra.mxu0 0
    %138 = vmatpush.bf16.msra.mxu0 0
    %139 = vmatpush.bf16.msra.mxu0 0
    %140 = vmatpush.bf16.msra.mxu0 0
    %141 = vmatpush.bf16.msra.mxu0 0
    %142 = vmatpush.bf16.msra.mxu0 0
    %143 = vmatpush.bf16.msra.mxu0 0
    %144 = vmatpush.bf16.msra.mxu0 %v135
    %145 = vmatmul.bf16.gmra.mxu0 %v133
    %v146 = vpop.f32.mrf.mxu0
    %v147 = vadd.f32 %v129, %v146
    %v148 = vpop.f32.mrf.mxu0
    %149 = vdwg.mxu0
    %v150 = vld [vmem:[%s65] sm:$0xf]
    %151 = vst [vmem:[#allocation1] ss:$4 sm:$0xff] %v104
    %v152 = vld.sshfl [vmem:[#allocation1] sm:$0xff pattern:$0x73625140]
    %154 = vrot.lane.b32.xlu0 %v152, 126
    %v155 = vpop.permute.xlu0 %154
    %v157 = vsel %vm26, %v150, 0
    %v160 = vsel %vm30, %v155, 0
    %162 = vmatpush.bf16.msra.mxu0 0
    %163 = vmatpush.bf16.msra.mxu0 0
    %164 = vmatpush.bf16.msra.mxu0 0
    %165 = vmatpush.bf16.msra.mxu0 0
    %166 = vmatpush.bf16.msra.mxu0 0
    %167 = vmatpush.bf16.msra.mxu0 0
    %168 = vmatpush.bf16.msra.mxu0 0
    %169 = vmatpush.bf16.msra.mxu0 %v160
    %170 = vmatmul.bf16.gmra.mxu0 %v157
    %v171 = vpop.f32.mrf.mxu0
    %v172 = vadd.f32 0.0, %v171
    %v173 = vpop.f32.mrf.mxu0
    %174 = vdwg.mxu0
    %v175 = vadd.f32 %v147, %v172
    %s176 = scalar_lea.vmem [#allocation2], 8
    %177 = vst.msk [vmem:[%s176] sm:$0xff] %vm92, %v175
    %v178 = vsel %vm92, %v175, 0.0
    %179 = vadd.xlane.f32.xlu0 %v178
    %v180 = vpop.xlane.xlu0 %179
    %v181 = vadd.f32 %v97, %v180
    %v182 = vmul.f32 %v175, %v175
    %v183 = vsel %vm92, %v182, 0.0
    %184 = vadd.xlane.f32.xlu0 %v183
    %v185 = vpop.xlane.xlu0 %184
    %v186 = vadd.f32 %v102, %v185
    %vm187 = vcmask 7168
    %188 = vst.msk [vmem:[%s3] sm:$0xff] %vm187, %v181
    %189 = vst.msk [vmem:[%s4] sm:$0xff] %vm187, %v186
    // Predicated region
    $region10: #{tpu_custom_call.1} parent=1 // pred_check
      _
    $region11: #{tpu_custom_call.1} parent=1 // pred_check_branch
      %191 = sbr.rel (0) target = $region13
    $region12: #{tpu_custom_call.1} parent=1 // pred_region
      %193 = vsyncadd [#allocation3], 0
      %s194 = sshll.u32 [#allocation2], 4
      %s195 = int_to_ptr.vmem [resolvable:$true] %s194
      %s196 = sshll.u32 %s2, 4
      %s197 = int_to_ptr.hbm [resolvable:$true] %s196
      %202 = dma.vmem_to_hbm [thread:$0]  %s195, 256, %s197, [#allocation3], 128, 128, 8
    $region13: #{tpu_custom_call.1} parent=1 // pred_fallthru
      _
    // Predicated region
    $region14: #{tpu_custom_call.1} parent=1 // pred_check
      _
    $region15: #{tpu_custom_call.1} parent=1 // pred_check_branch
      %204 = sbr.rel (0) target = $region17
    $region16: #{tpu_custom_call.1} parent=1 // pred_region
      _
    $region17: #{tpu_custom_call.1} parent=1 // pred_fallthru
      _
    // Predicated region
    $region18: #{tpu_custom_call.1} parent=1 // pred_check
      _
    $region19: #{tpu_custom_call.1} parent=1 // pred_check_branch
      %206 = sbr.rel (0) target = $region21
    $region20: #{tpu_custom_call.1} parent=1 // pred_region
      _
    $region21: #{tpu_custom_call.1} parent=1 // pred_fallthru
      _
    // Predicated region
    $region22: #{tpu_custom_call.1} parent=1 // pred_check
      _
    $region23: #{tpu_custom_call.1} parent=1 // pred_check_branch
      %208 = sbr.rel (0) target = $region25
    $region24: #{tpu_custom_call.1} parent=1 // pred_region
      %210 = dma.done [#allocation3], 256
    $region25: #{tpu_custom_call.1} parent=1 // pred_fallthru
      _
    // Predicated region
    $region26: #{tpu_custom_call.1} parent=1 // pred_check
      _
    $region27: #{tpu_custom_call.1} parent=1 // pred_check_branch
      %212 = sbr.rel (0) target = $region29
    $region28: #{tpu_custom_call.1} parent=1 // pred_region
      _
    $region29: #{tpu_custom_call.1} parent=1 // pred_fallthru
      _
    // Predicated region
    $region30: #{tpu_custom_call.1} parent=1 // pred_check
      _
    $region31: #{tpu_custom_call.1} parent=1 // pred_check_branch
      %214 = sbr.rel (0) target = $region33
    $region32: #{tpu_custom_call.1} parent=1 // pred_region
      _
    $region33: #{tpu_custom_call.1} parent=1 // pred_fallthru
      _
    %215 = vsyncpa [#allocation3], 1

</llo_original>
